<compile_context>
chip_gen: v7x
topology: tpu7x:2x2x1
jax: 0.10.0
libtpu: 0.0.40
codegen_flags: <defaults>
</compile_context>

<pallas_src>
import jax
import jax.numpy as jnp
from jax.experimental import pallas as pl
from jax.experimental.pallas import tpu as pltpu


# ----------------------------- configuration --------------------------------
NUM_CLASS = 10
NUM_SEGMENTS = 8          # T
BATCH = 2                 # N
CHANNELS = 3              # forward() hard-codes 3 channels
HW = 16                   # spatial H = W
FEATURE_DIM = 512         # resnet18/34 convention from _prepare_base_model
DROPOUT = 0.3             # > 0  ->  base_model.fc = Dropout, new_fc = Linear

K_DIM = CHANNELS * HW * HW  # 768, flattened per-frame pixel count


# ------------------------------ Pallas kernel --------------------------------
def _backbone_kernel(frames_ref, wproj_ref, out_ref):
    """Fused temporal mean-pool + surrogate-backbone projection.

    frames_ref : (N, T, K_DIM)        f32  per-clip flattened frames
    wproj_ref  : (K_DIM, FEATURE_DIM) bf16 surrogate-backbone weights
    out_ref    : (N, FEATURE_DIM)     f32  clip-level features (== base_out)
    """
    # Temporal mean pooling (VPU, T=8 -> negligible) fused with the matmul.
    # Pooling commutes with the linear projection, so pool-then-project is
    # algebraically equivalent to project-then-average.
    pooled = jnp.mean(frames_ref[...], axis=1).astype(jnp.bfloat16)  # (N, K)

    # Single full-K bf16 MXU matmul with f32 accumulation.
    # Dropout (p=0.3) at the backbone head is identity at inference time.
    out_ref[...] = jnp.dot(pooled, wproj_ref[...],
                           preferred_element_type=jnp.float32)


def _run_backbone(frames_f32, w_proj_bf16):
    n, t, k = frames_f32.shape
    _, f = w_proj_bf16.shape

    # Total VMEM footprint: frames 49 KB + weights 768 KB + out 4 KB -> no
    # grid, no double buffering needed; one DMA per operand, one MXU pass.
    return pl.pallas_call(
        _backbone_kernel,
        out_shape=jax.ShapeDtypeStruct((n, f), jnp.float32),
        in_specs=[
            pl.BlockSpec((n, t, k), lambda: (0, 0, 0)),   # full clip block
            pl.BlockSpec((k, f), lambda: (0, 0)),         # full weight slab
        ],
        out_specs=pl.BlockSpec((n, f), lambda: (0, 0)),
    )(frames_f32, w_proj_bf16)


# ------------------------------ model wrapper --------------------------------
def init_params(key):
    k_proj, k_fc = jax.random.split(key)
    # Surrogate backbone projection (stand-in for SBT resnet weights),
    # stored in bf16 to halve the dominant HBM->VMEM weight transfer.
    w_proj = (jax.random.normal(k_proj, (K_DIM, FEATURE_DIM),
                                dtype=jnp.float32) * 0.02).astype(jnp.bfloat16)
    # new_fc from __init__: normal_(std=0.001) weight, zero bias.
    # NOTE: new_fc is *not* applied in forward() (forward returns base_out),
    # but it is initialized here to mirror the PyTorch __init__.
    new_fc_w = (jax.random.normal(k_fc, (FEATURE_DIM, NUM_CLASS),
                                  dtype=jnp.float32) * 0.001)
    new_fc_b = jnp.zeros((NUM_CLASS,), dtype=jnp.float32)
    return {"w_proj": w_proj, "new_fc_w": new_fc_w, "new_fc_b": new_fc_b}


@jax.jit
def temporal_model_forward(params, x):
    """x: (N*T, 3, H, W) float32  ->  base_out: (N, FEATURE_DIM) float32."""
    nt = x.shape[0]
    n = nt // NUM_SEGMENTS

    # PyTorch glue: view -> (N,T,3,H,W), transpose(1,2) -> (N,3,T,H,W).
    # A per-frame backbone immediately folds T back into the batch, so the
    # two transposes cancel; reshape straight to per-clip flattened frames.
    frames = jnp.reshape(x, (n, NUM_SEGMENTS, K_DIM))          # (N, T, C*H*W)

    # ---- single fused Pallas kernel: mean over T + bf16 cast + MXU matmul ----
    base_out = _run_backbone(frames, params["w_proj"])
    return base_out


# ---------------------------------- main -------------------------------------
if __name__ == "__main__":
    key = jax.random.PRNGKey(0)
    k_params, k_x = jax.random.split(key)

    params = init_params(k_params)
    # Input mimics the stacked-frame layout fed to TemporalModel:
    # (N*T, 3, H, W) = (16, 3, 16, 16)
    x = jax.random.normal(k_x, (BATCH * NUM_SEGMENTS, CHANNELS, HW, HW),
                          dtype=jnp.float32)

    out = temporal_model_forward(params, x)
    out = jax.block_until_ready(out)

    assert out.shape == (BATCH, FEATURE_DIM), out.shape
    assert out.dtype == jnp.float32

    # Reference check of the Pallas hot path against plain JAX, using the same
    # bf16-cast pooled operand with f32 accumulation as the MXU path.
    pooled_ref = jnp.mean(jnp.reshape(x, (BATCH, NUM_SEGMENTS, K_DIM)), axis=1)
    ref = jnp.dot(pooled_ref.astype(jnp.bfloat16).astype(jnp.float32),
                  params["w_proj"].astype(jnp.float32))
    assert jnp.allclose(out, ref, atol=2e-3, rtol=2e-3), (
        float(jnp.max(jnp.abs(out - ref))))

    print("KERNEL_OK")
</pallas_src>

<mosaic_0001>
module attributes {stable_mosaic.version = 11 : i64} {
  func.func @_backbone_kernel(%arg0: memref<2x8x768xf32, #tpu.memory_space<vmem>>, %arg1: memref<768x512xbf16, #tpu.memory_space<vmem>>, %arg2: memref<2x512xf32, #tpu.memory_space<vmem>>) attributes {dimension_semantics = [], scalar_prefetch = 0 : i64, scratch_operands = 0 : i64, tpu.core_type = #tpu.core_type<tc>} {
    %c0 = arith.constant 0 : index
    %c0_0 = arith.constant 0 : index
    %c0_1 = arith.constant 0 : index
    %0 = vector.load %arg0[%c0, %c0_0, %c0_1] : memref<2x8x768xf32, #tpu.memory_space<vmem>>, vector<2x8x768xf32>
    %cst = arith.constant dense<0.000000e+00> : vector<2x768xf32>
    %1 = vector.multi_reduction <add>, %0, %cst [1] : vector<2x8x768xf32> to vector<2x768xf32>
    %cst_2 = arith.constant 8.000000e+00 : f32
    %2 = vector.broadcast %cst_2 : f32 to vector<2x768xf32>
    %3 = arith.divf %1, %2 : vector<2x768xf32>
    %4 = arith.truncf %3 : vector<2x768xf32> to vector<2x768xbf16>
    %c0_3 = arith.constant 0 : index
    %c0_4 = arith.constant 0 : index
    %5 = vector.load %arg1[%c0_3, %c0_4] : memref<768x512xbf16, #tpu.memory_space<vmem>>, vector<768x512xbf16>
    %cst_5 = arith.constant dense<0.000000e+00> : vector<2x512xf32>
    %6 = tpu.matmul %4, %5, %cst_5 {dimension_numbers = #tpu.dot_dimension_numbers<[1], [0], [0], [1], [0, 0, 1, 1], [], []>} : vector<2x768xbf16>, vector<768x512xbf16>, vector<2x512xf32> -> vector<2x512xf32>
    %c0_6 = arith.constant 0 : index
    %c0_7 = arith.constant 0 : index
    %7 = vector.load %arg2[%c0_6, %c0_7] : memref<2x512xf32, #tpu.memory_space<vmem>>, vector<2x512xf32>
    tpu.vector_store %arg2[%c0_6, %c0_7], %6 {strides = array<i32>} : memref<2x512xf32, #tpu.memory_space<vmem>>, vector<2x512xf32>,
    return
  }
}

</mosaic_0001>

<llo_original>
// kernel: temporal_model_forward.1
$region0: #{temporal_model_forward.1}
  #allocation0 [shape = 'u32[]', space=smem, size = 0x4, offset = 0x4, fixed_abs, tag = 'smem constant byte address 0x4 - core index']
  #allocation1 [shape = 'u32[144,128]{1,0:T(1,128)}', space=vmem, size = 0x12000, scoped, tag = 'internal scratch']
  %s0 = inlined_call_operand.vmem [shape: f32[2,8,768], index: 0, kind: input, shape index: {}]
  %s1 = inlined_call_operand.hbm [shape: bf16[768,512], index: 1, kind: input, shape index: {}]
  %s2 = inlined_call_operand.hbm [shape: f32[2,512], index: 2, kind: output, shape index: {}]
  %s3 = sld [smem:[#allocation0]]
  $region22: #{temporal_model_forward.1} parent=0
    _
  %s5 = ssub.s32 1, %s3
  %s6 = scalar_select 0, %s5, %s3
  $region1: #{temporal_model_forward.1} parent=0
    #allocation2 [shape = 'u8[786432]{0}', space=vmem, size = 0xc0000, scoped, tag = 'input window, operand 1, single buffered']
    #allocation3 [shape = 's32[1]{0}', space=sflag, size = 0x4, scoped, tag = 'scoped memory for temporal_model_forward.1']
    #allocation4 [shape = 's32[1]{0}', space=sflag, size = 0x4, scoped, tag = 'scoped memory for temporal_model_forward.1']
    #allocation5 [shape = 'u8[4096]{0}', space=vmem, size = 0x1000, scoped, tag = 'output window, operand 0, single buffered']
    %7 = vsyncpa [#allocation3], 0
    %8 = vsyncpa [#allocation4], 0
    // Predicated region
    $region2: #{temporal_model_forward.1} parent=1 // pred_check
      _
    $region3: #{temporal_model_forward.1} parent=1 // pred_check_branch
      %10 = sbr.rel (0) target = $region5
    $region4: #{temporal_model_forward.1} parent=1 // pred_region
      _
    $region5: #{temporal_model_forward.1} parent=1 // pred_fallthru
      _
    // Predicated region
    $region6: #{temporal_model_forward.1} parent=1 // pred_check
      _
    $region7: #{temporal_model_forward.1} parent=1 // pred_check_branch
      %12 = sbr.rel (0) target = $region9
    $region8: #{temporal_model_forward.1} parent=1 // pred_region
      %s14 = ssub.s32 24576, 24576
      %15 = vsyncadd [#allocation3], %s14
      %s16 = sshll.u32 [#allocation2], 4
      %s17 = int_to_ptr.vmem [resolvable:$true] %s16
      %22 = dma.hbm_to_vmem [thread:$0]  %s1, 24576, %s17, [#allocation3], 256, 256, 16
    $region9: #{temporal_model_forward.1} parent=1 // pred_fallthru
      _
    // Predicated region
    $region10: #{temporal_model_forward.1} parent=1 // pred_check
      _
    $region11: #{temporal_model_forward.1} parent=1 // pred_check_branch
      %24 = sbr.rel (0) target = $region13
    $region12: #{temporal_model_forward.1} parent=1 // pred_region
      %25 = dma.done [#allocation3], 24576
    $region13: #{temporal_model_forward.1} parent=1 // pred_fallthru
      _
    %v26 = vld [vmem:[%s0] sm:$0xff]
    %v27 = vld [vmem:[%s0 + $0x8] sm:$0xff]
    %v28 = vld [vmem:[%s0 + $0x10] sm:$0xff]
    %v29 = vld [vmem:[%s0 + $0x18] sm:$0xff]
    %v30 = vld [vmem:[%s0 + $0x20] sm:$0xff]
    %v31 = vld [vmem:[%s0 + $0x28] sm:$0xff]
    %v32 = vld [vmem:[%s0 + $0x30] sm:$0xff]
    %v33 = vld [vmem:[%s0 + $0x38] sm:$0xff]
    %v34 = vld [vmem:[%s0 + $0x40] sm:$0xff]
    %v35 = vld [vmem:[%s0 + $0x48] sm:$0xff]
    %v36 = vld [vmem:[%s0 + $0x50] sm:$0xff]
    %v37 = vld [vmem:[%s0 + $0x58] sm:$0xff]
    %v38 = vrot.slane %v26, 4
    %v39 = vadd.f32 %v26, %v38
    %v40 = vrot.slane %v39, 2
    %v41 = vadd.f32 %v39, %v40
    %v42 = vrot.slane %v41, 1
    %v43 = vadd.f32 %v41, %v42
    %v44 = vrot.slane %v27, 4
    %v45 = vadd.f32 %v27, %v44
    %v46 = vrot.slane %v45, 2
    %v47 = vadd.f32 %v45, %v46
    %v48 = vrot.slane %v47, 1
    %v49 = vadd.f32 %v47, %v48
    %v50 = vrot.slane %v28, 4
    %v51 = vadd.f32 %v28, %v50
    %v52 = vrot.slane %v51, 2
    %v53 = vadd.f32 %v51, %v52
    %v54 = vrot.slane %v53, 1
    %v55 = vadd.f32 %v53, %v54
    %v56 = vrot.slane %v29, 4
    %v57 = vadd.f32 %v29, %v56
    %v58 = vrot.slane %v57, 2
    %v59 = vadd.f32 %v57, %v58
    %v60 = vrot.slane %v59, 1
    %v61 = vadd.f32 %v59, %v60
    %v62 = vrot.slane %v30, 4
    %v63 = vadd.f32 %v30, %v62
    %v64 = vrot.slane %v63, 2
    %v65 = vadd.f32 %v63, %v64
    %v66 = vrot.slane %v65, 1
    %v67 = vadd.f32 %v65, %v66
    %v68 = vrot.slane %v31, 4
    %v69 = vadd.f32 %v31, %v68
    %v70 = vrot.slane %v69, 2
    %v71 = vadd.f32 %v69, %v70
    %v72 = vrot.slane %v71, 1
    %v73 = vadd.f32 %v71, %v72
    %v74 = vrot.slane %v32, 4
    %v75 = vadd.f32 %v32, %v74
    %v76 = vrot.slane %v75, 2
    %v77 = vadd.f32 %v75, %v76
    %v78 = vrot.slane %v77, 1
    %v79 = vadd.f32 %v77, %v78
    %v80 = vrot.slane %v33, 4
    %v81 = vadd.f32 %v33, %v80
    %v82 = vrot.slane %v81, 2
    %v83 = vadd.f32 %v81, %v82
    %v84 = vrot.slane %v83, 1
    %v85 = vadd.f32 %v83, %v84
    %v86 = vrot.slane %v34, 4
    %v87 = vadd.f32 %v34, %v86
    %v88 = vrot.slane %v87, 2
    %v89 = vadd.f32 %v87, %v88
    %v90 = vrot.slane %v89, 1
    %v91 = vadd.f32 %v89, %v90
    %v92 = vrot.slane %v35, 4
    %v93 = vadd.f32 %v35, %v92
    %v94 = vrot.slane %v93, 2
    %v95 = vadd.f32 %v93, %v94
    %v96 = vrot.slane %v95, 1
    %v97 = vadd.f32 %v95, %v96
    %v98 = vrot.slane %v36, 4
    %v99 = vadd.f32 %v36, %v98
    %v100 = vrot.slane %v99, 2
    %v101 = vadd.f32 %v99, %v100
    %v102 = vrot.slane %v101, 1
    %v103 = vadd.f32 %v101, %v102
    %v104 = vrot.slane %v37, 4
    %v105 = vadd.f32 %v37, %v104
    %v106 = vrot.slane %v105, 2
    %v107 = vadd.f32 %v105, %v106
    %v108 = vrot.slane %v107, 1
    %v109 = vadd.f32 %v107, %v108
    %v110 = vrcp.pop 8.0
    %v111 = vmul.f32 %v43, %v110
    %v112 = vmul.f32 %v49, %v110
    %v113 = vmul.f32 %v55, %v110
    %v114 = vmul.f32 %v61, %v110
    %v115 = vmul.f32 %v67, %v110
    %v116 = vmul.f32 %v73, %v110
    %v117 = vmul.f32 %v79, %v110
    %v118 = vmul.f32 %v85, %v110
    %v119 = vmul.f32 %v91, %v110
    %v120 = vmul.f32 %v97, %v110
    %v121 = vmul.f32 %v103, %v110
    %v122 = vmul.f32 %v109, %v110
    %v123 = vpack.c.bf16 %v111, %v111
    %v124 = vpack.c.bf16 %v112, %v112
    %v125 = vpack.c.bf16 %v113, %v113
    %v126 = vpack.c.bf16 %v114, %v114
    %v127 = vpack.c.bf16 %v115, %v115
    %v128 = vpack.c.bf16 %v116, %v116
    %v129 = vpack.c.bf16 %v117, %v117
    %v130 = vpack.c.bf16 %v118, %v118
    %v131 = vpack.c.bf16 %v119, %v119
    %v132 = vpack.c.bf16 %v120, %v120
    %v133 = vpack.c.bf16 %v121, %v121
    %v134 = vpack.c.bf16 %v122, %v122
    %v135 = vld [vmem:[#allocation2] sm:$0xff]
    %v136 = vld [vmem:[#allocation2 + $0x8] sm:$0xff]
    %v137 = vld [vmem:[#allocation2 + $0x10] sm:$0xff]
    %v138 = vld [vmem:[#allocation2 + $0x18] sm:$0xff]
    %v139 = vld [vmem:[#allocation2 + $0x20] sm:$0xff]
    %v140 = vld [vmem:[#allocation2 + $0x28] sm:$0xff]
    %v141 = vld [vmem:[#allocation2 + $0x30] sm:$0xff]
    %v142 = vld [vmem:[#allocation2 + $0x38] sm:$0xff]
    %v143 = vld [vmem:[#allocation2 + $0x40] sm:$0xff]
    %v144 = vld [vmem:[#allocation2 + $0x48] sm:$0xff]
    %v145 = vld [vmem:[#allocation2 + $0x50] sm:$0xff]
    %v146 = vld [vmem:[#allocation2 + $0x58] sm:$0xff]
    %v147 = vld [vmem:[#allocation2 + $0x60] sm:$0xff]
    %v148 = vld [vmem:[#allocation2 + $0x68] sm:$0xff]
    %v149 = vld [vmem:[#allocation2 + $0x70] sm:$0xff]
    %v150 = vld [vmem:[#allocation2 + $0x78] sm:$0xff]
    %v151 = vld [vmem:[#allocation2 + $0x80] sm:$0xff]
    %v152 = vld [vmem:[#allocation2 + $0x88] sm:$0xff]
    %v153 = vld [vmem:[#allocation2 + $0x90] sm:$0xff]
    %v154 = vld [vmem:[#allocation2 + $0x98] sm:$0xff]
    %v155 = vld [vmem:[#allocation2 + $0xa0] sm:$0xff]
    %v156 = vld [vmem:[#allocation2 + $0xa8] sm:$0xff]
    %v157 = vld [vmem:[#allocation2 + $0xb0] sm:$0xff]
    %v158 = vld [vmem:[#allocation2 + $0xb8] sm:$0xff]
    %v159 = vld [vmem:[#allocation2 + $0xc0] sm:$0xff]
    %v160 = vld [vmem:[#allocation2 + $0xc8] sm:$0xff]
    %v161 = vld [vmem:[#allocation2 + $0xd0] sm:$0xff]
    %v162 = vld [vmem:[#allocation2 + $0xd8] sm:$0xff]
    %v163 = vld [vmem:[#allocation2 + $0xe0] sm:$0xff]
    %v164 = vld [vmem:[#allocation2 + $0xe8] sm:$0xff]
    %v165 = vld [vmem:[#allocation2 + $0xf0] sm:$0xff]
    %v166 = vld [vmem:[#allocation2 + $0xf8] sm:$0xff]
    %v167 = vld [vmem:[#allocation2 + $0x100] sm:$0xff]
    %v168 = vld [vmem:[#allocation2 + $0x108] sm:$0xff]
    %v169 = vld [vmem:[#allocation2 + $0x110] sm:$0xff]
    %v170 = vld [vmem:[#allocation2 + $0x118] sm:$0xff]
    %v171 = vld [vmem:[#allocation2 + $0x120] sm:$0xff]
    %v172 = vld [vmem:[#allocation2 + $0x128] sm:$0xff]
    %v173 = vld [vmem:[#allocation2 + $0x130] sm:$0xff]
    %v174 = vld [vmem:[#allocation2 + $0x138] sm:$0xff]
    %v175 = vld [vmem:[#allocation2 + $0x140] sm:$0xff]
    %v176 = vld [vmem:[#allocation2 + $0x148] sm:$0xff]
    %v177 = vld [vmem:[#allocation2 + $0x150] sm:$0xff]
    %v178 = vld [vmem:[#allocation2 + $0x158] sm:$0xff]
    %v179 = vld [vmem:[#allocation2 + $0x160] sm:$0xff]
    %v180 = vld [vmem:[#allocation2 + $0x168] sm:$0xff]
    %v181 = vld [vmem:[#allocation2 + $0x170] sm:$0xff]
    %v182 = vld [vmem:[#allocation2 + $0x178] sm:$0xff]
    %v183 = vld [vmem:[#allocation2 + $0x180] sm:$0xff]
    %v184 = vld [vmem:[#allocation2 + $0x188] sm:$0xff]
    %v185 = vld [vmem:[#allocation2 + $0x190] sm:$0xff]
    %v186 = vld [vmem:[#allocation2 + $0x198] sm:$0xff]
    %v187 = vld [vmem:[#allocation2 + $0x1a0] sm:$0xff]
    %v188 = vld [vmem:[#allocation2 + $0x1a8] sm:$0xff]
    %v189 = vld [vmem:[#allocation2 + $0x1b0] sm:$0xff]
    %v190 = vld [vmem:[#allocation2 + $0x1b8] sm:$0xff]
    %v191 = vld [vmem:[#allocation2 + $0x1c0] sm:$0xff]
    %v192 = vld [vmem:[#allocation2 + $0x1c8] sm:$0xff]
    %v193 = vld [vmem:[#allocation2 + $0x1d0] sm:$0xff]
    %v194 = vld [vmem:[#allocation2 + $0x1d8] sm:$0xff]
    %v195 = vld [vmem:[#allocation2 + $0x1e0] sm:$0xff]
    %v196 = vld [vmem:[#allocation2 + $0x1e8] sm:$0xff]
    %v197 = vld [vmem:[#allocation2 + $0x1f0] sm:$0xff]
    %v198 = vld [vmem:[#allocation2 + $0x1f8] sm:$0xff]
    %v199 = vld [vmem:[#allocation2 + $0x200] sm:$0xff]
    %v200 = vld [vmem:[#allocation2 + $0x208] sm:$0xff]
    %v201 = vld [vmem:[#allocation2 + $0x210] sm:$0xff]
    %v202 = vld [vmem:[#allocation2 + $0x218] sm:$0xff]
    %v203 = vld [vmem:[#allocation2 + $0x220] sm:$0xff]
    %v204 = vld [vmem:[#allocation2 + $0x228] sm:$0xff]
    %v205 = vld [vmem:[#allocation2 + $0x230] sm:$0xff]
    %v206 = vld [vmem:[#allocation2 + $0x238] sm:$0xff]
    %v207 = vld [vmem:[#allocation2 + $0x240] sm:$0xff]
    %v208 = vld [vmem:[#allocation2 + $0x248] sm:$0xff]
    %v209 = vld [vmem:[#allocation2 + $0x250] sm:$0xff]
    %v210 = vld [vmem:[#allocation2 + $0x258] sm:$0xff]
    %v211 = vld [vmem:[#allocation2 + $0x260] sm:$0xff]
    %v212 = vld [vmem:[#allocation2 + $0x268] sm:$0xff]
    %v213 = vld [vmem:[#allocation2 + $0x270] sm:$0xff]
    %v214 = vld [vmem:[#allocation2 + $0x278] sm:$0xff]
    %v215 = vld [vmem:[#allocation2 + $0x280] sm:$0xff]
    %v216 = vld [vmem:[#allocation2 + $0x288] sm:$0xff]
    %v217 = vld [vmem:[#allocation2 + $0x290] sm:$0xff]
    %v218 = vld [vmem:[#allocation2 + $0x298] sm:$0xff]
    %v219 = vld [vmem:[#allocation2 + $0x2a0] sm:$0xff]
    %v220 = vld [vmem:[#allocation2 + $0x2a8] sm:$0xff]
    %v221 = vld [vmem:[#allocation2 + $0x2b0] sm:$0xff]
    %v222 = vld [vmem:[#allocation2 + $0x2b8] sm:$0xff]
    %v223 = vld [vmem:[#allocation2 + $0x2c0] sm:$0xff]
    %v224 = vld [vmem:[#allocation2 + $0x2c8] sm:$0xff]
    %v225 = vld [vmem:[#allocation2 + $0x2d0] sm:$0xff]
    %v226 = vld [vmem:[#allocation2 + $0x2d8] sm:$0xff]
    %v227 = vld [vmem:[#allocation2 + $0x2e0] sm:$0xff]
    %v228 = vld [vmem:[#allocation2 + $0x2e8] sm:$0xff]
    %v229 = vld [vmem:[#allocation2 + $0x2f0] sm:$0xff]
    %v230 = vld [vmem:[#allocation2 + $0x2f8] sm:$0xff]
    %v231 = vld [vmem:[#allocation2 + $0x300] sm:$0xff]
    %v232 = vld [vmem:[#allocation2 + $0x308] sm:$0xff]
    %v233 = vld [vmem:[#allocation2 + $0x310] sm:$0xff]
    %v234 = vld [vmem:[#allocation2 + $0x318] sm:$0xff]
    %v235 = vld [vmem:[#allocation2 + $0x320] sm:$0xff]
    %v236 = vld [vmem:[#allocation2 + $0x328] sm:$0xff]
    %v237 = vld [vmem:[#allocation2 + $0x330] sm:$0xff]
    %v238 = vld [vmem:[#allocation2 + $0x338] sm:$0xff]
    %v239 = vld [vmem:[#allocation2 + $0x340] sm:$0xff]
    %v240 = vld [vmem:[#allocation2 + $0x348] sm:$0xff]
    %v241 = vld [vmem:[#allocation2 + $0x350] sm:$0xff]
    %v242 = vld [vmem:[#allocation2 + $0x358] sm:$0xff]
    %v243 = vld [vmem:[#allocation2 + $0x360] sm:$0xff]
    %v244 = vld [vmem:[#allocation2 + $0x368] sm:$0xff]
    %v245 = vld [vmem:[#allocation2 + $0x370] sm:$0xff]
    %v246 = vld [vmem:[#allocation2 + $0x378] sm:$0xff]
    %v247 = vld [vmem:[#allocation2 + $0x380] sm:$0xff]
    %v248 = vld [vmem:[#allocation2 + $0x388] sm:$0xff]
    %v249 = vld [vmem:[#allocation2 + $0x390] sm:$0xff]
    %v250 = vld [vmem:[#allocation2 + $0x398] sm:$0xff]
    %v251 = vld [vmem:[#allocation2 + $0x3a0] sm:$0xff]
    %v252 = vld [vmem:[#allocation2 + $0x3a8] sm:$0xff]
    %v253 = vld [vmem:[#allocation2 + $0x3b0] sm:$0xff]
    %v254 = vld [vmem:[#allocation2 + $0x3b8] sm:$0xff]
    %v255 = vld [vmem:[#allocation2 + $0x3c0] sm:$0xff]
    %v256 = vld [vmem:[#allocation2 + $0x3c8] sm:$0xff]
    %v257 = vld [vmem:[#allocation2 + $0x3d0] sm:$0xff]
    %v258 = vld [vmem:[#allocation2 + $0x3d8] sm:$0xff]
    %v259 = vld [vmem:[#allocation2 + $0x3e0] sm:$0xff]
    %v260 = vld [vmem:[#allocation2 + $0x3e8] sm:$0xff]
    %v261 = vld [vmem:[#allocation2 + $0x3f0] sm:$0xff]
    %v262 = vld [vmem:[#allocation2 + $0x3f8] sm:$0xff]
    %v263 = vld [vmem:[#allocation2 + $0x400] sm:$0xff]
    %v264 = vld [vmem:[#allocation2 + $0x408] sm:$0xff]
    %v265 = vld [vmem:[#allocation2 + $0x410] sm:$0xff]
    %v266 = vld [vmem:[#allocation2 + $0x418] sm:$0xff]
    %v267 = vld [vmem:[#allocation2 + $0x420] sm:$0xff]
    %v268 = vld [vmem:[#allocation2 + $0x428] sm:$0xff]
    %v269 = vld [vmem:[#allocation2 + $0x430] sm:$0xff]
    %v270 = vld [vmem:[#allocation2 + $0x438] sm:$0xff]
    %v271 = vld [vmem:[#allocation2 + $0x440] sm:$0xff]
    %v272 = vld [vmem:[#allocation2 + $0x448] sm:$0xff]
    %v273 = vld [vmem:[#allocation2 + $0x450] sm:$0xff]
    %v274 = vld [vmem:[#allocation2 + $0x458] sm:$0xff]
    %v275 = vld [vmem:[#allocation2 + $0x460] sm:$0xff]
    %v276 = vld [vmem:[#allocation2 + $0x468] sm:$0xff]
    %v277 = vld [vmem:[#allocation2 + $0x470] sm:$0xff]
    %v278 = vld [vmem:[#allocation2 + $0x478] sm:$0xff]
    %v279 = vld [vmem:[#allocation2 + $0x480] sm:$0xff]
    %v280 = vld [vmem:[#allocation2 + $0x488] sm:$0xff]
    %v281 = vld [vmem:[#allocation2 + $0x490] sm:$0xff]
    %v282 = vld [vmem:[#allocation2 + $0x498] sm:$0xff]
    %v283 = vld [vmem:[#allocation2 + $0x4a0] sm:$0xff]
    %v284 = vld [vmem:[#allocation2 + $0x4a8] sm:$0xff]
    %v285 = vld [vmem:[#allocation2 + $0x4b0] sm:$0xff]
    %v286 = vld [vmem:[#allocation2 + $0x4b8] sm:$0xff]
    %v287 = vld [vmem:[#allocation2 + $0x4c0] sm:$0xff]
    %v288 = vld [vmem:[#allocation2 + $0x4c8] sm:$0xff]
    %v289 = vld [vmem:[#allocation2 + $0x4d0] sm:$0xff]
    %v290 = vld [vmem:[#allocation2 + $0x4d8] sm:$0xff]
    %v291 = vld [vmem:[#allocation2 + $0x4e0] sm:$0xff]
    %v292 = vld [vmem:[#allocation2 + $0x4e8] sm:$0xff]
    %v293 = vld [vmem:[#allocation2 + $0x4f0] sm:$0xff]
    %v294 = vld [vmem:[#allocation2 + $0x4f8] sm:$0xff]
    %v295 = vld [vmem:[#allocation2 + $0x500] sm:$0xff]
    %v296 = vld [vmem:[#allocation2 + $0x508] sm:$0xff]
    %v297 = vld [vmem:[#allocation2 + $0x510] sm:$0xff]
    %v298 = vld [vmem:[#allocation2 + $0x518] sm:$0xff]
    %v299 = vld [vmem:[#allocation2 + $0x520] sm:$0xff]
    %v300 = vld [vmem:[#allocation2 + $0x528] sm:$0xff]
    %v301 = vld [vmem:[#allocation2 + $0x530] sm:$0xff]
    %v302 = vld [vmem:[#allocation2 + $0x538] sm:$0xff]
    %v303 = vld [vmem:[#allocation2 + $0x540] sm:$0xff]
    %v304 = vld [vmem:[#allocation2 + $0x548] sm:$0xff]
    %v305 = vld [vmem:[#allocation2 + $0x550] sm:$0xff]
    %v306 = vld [vmem:[#allocation2 + $0x558] sm:$0xff]
    %v307 = vld [vmem:[#allocation2 + $0x560] sm:$0xff]
    %v308 = vld [vmem:[#allocation2 + $0x568] sm:$0xff]
    %v309 = vld [vmem:[#allocation2 + $0x570] sm:$0xff]
    %v310 = vld [vmem:[#allocation2 + $0x578] sm:$0xff]
    %v311 = vld [vmem:[#allocation2 + $0x580] sm:$0xff]
    %v312 = vld [vmem:[#allocation2 + $0x588] sm:$0xff]
    %v313 = vld [vmem:[#allocation2 + $0x590] sm:$0xff]
    %v314 = vld [vmem:[#allocation2 + $0x598] sm:$0xff]
    %v315 = vld [vmem:[#allocation2 + $0x5a0] sm:$0xff]
    %v316 = vld [vmem:[#allocation2 + $0x5a8] sm:$0xff]
    %v317 = vld [vmem:[#allocation2 + $0x5b0] sm:$0xff]
    %v318 = vld [vmem:[#allocation2 + $0x5b8] sm:$0xff]
    %v319 = vld [vmem:[#allocation2 + $0x5c0] sm:$0xff]
    %v320 = vld [vmem:[#allocation2 + $0x5c8] sm:$0xff]
    %v321 = vld [vmem:[#allocation2 + $0x5d0] sm:$0xff]
    %v322 = vld [vmem:[#allocation2 + $0x5d8] sm:$0xff]
    %v323 = vld [vmem:[#allocation2 + $0x5e0] sm:$0xff]
    %v324 = vld [vmem:[#allocation2 + $0x5e8] sm:$0xff]
    %v325 = vld [vmem:[#allocation2 + $0x5f0] sm:$0xff]
    %v326 = vld [vmem:[#allocation2 + $0x5f8] sm:$0xff]
    %v339 = vunpack.c.l.b16 %v123
    %v340 = vunpack.c.l.b16 %v124
    %v341 = vunpack.c.l.b16 %v125
    %v342 = vunpack.c.l.b16 %v126
    %v343 = vunpack.c.l.b16 %v127
    %v344 = vunpack.c.l.b16 %v128
    %v345 = vunpack.c.l.b16 %v129
    %v346 = vunpack.c.l.b16 %v130
    %v347 = vunpack.c.l.b16 %v131
    %v348 = vunpack.c.l.b16 %v132
    %v349 = vunpack.c.l.b16 %v133
    %v350 = vunpack.c.l.b16 %v134
    %vm351 = vcmask 1041409
    %v352 = vsel %vm351, %v345, %v339
    %v353 = vsel %vm351, %v346, %v340
    %v354 = vsel %vm351, %v347, %v341
    %v355 = vsel %vm351, %v348, %v342
    %v356 = vsel %vm351, %v349, %v343
    %v357 = vsel %vm351, %v350, %v344
    %v358 = vpack.c.b16 %v352, %v352
    %v359 = vpack.c.b16 %v353, %v353
    %v360 = vpack.c.b16 %v354, %v354
    %v361 = vpack.c.b16 %v355, %v355
    %v362 = vpack.c.b16 %v356, %v356
    %v363 = vpack.c.b16 %v357, %v357
    %v562 = vunpack.c.l.b16 %v135
    %v563 = vunpack.c.h.b16 %v135
    %v564 = vunpack.c.l.b16 %v136
    %v565 = vunpack.c.h.b16 %v136
    %v566 = vunpack.c.l.b16 %v137
    %v567 = vunpack.c.h.b16 %v137
    %v568 = vunpack.c.l.b16 %v138
    %v569 = vunpack.c.h.b16 %v138
    %v570 = vunpack.c.l.b16 %v139
    %v571 = vunpack.c.h.b16 %v139
    %v572 = vunpack.c.l.b16 %v140
    %v573 = vunpack.c.h.b16 %v140
    %v574 = vunpack.c.l.b16 %v141
    %v575 = vunpack.c.h.b16 %v141
    %v576 = vunpack.c.l.b16 %v142
    %v577 = vunpack.c.h.b16 %v142
    %v578 = vunpack.c.l.b16 %v143
    %v579 = vunpack.c.h.b16 %v143
    %v580 = vunpack.c.l.b16 %v144
    %v581 = vunpack.c.h.b16 %v144
    %v582 = vunpack.c.l.b16 %v145
    %v583 = vunpack.c.h.b16 %v145
    %v584 = vunpack.c.l.b16 %v146
    %v585 = vunpack.c.h.b16 %v146
    %v586 = vunpack.c.l.b16 %v147
    %v587 = vunpack.c.h.b16 %v147
    %v588 = vunpack.c.l.b16 %v148
    %v589 = vunpack.c.h.b16 %v148
    %v590 = vunpack.c.l.b16 %v149
    %v591 = vunpack.c.h.b16 %v149
    %v592 = vunpack.c.l.b16 %v150
    %v593 = vunpack.c.h.b16 %v150
    %v594 = vunpack.c.l.b16 %v151
    %v595 = vunpack.c.h.b16 %v151
    %v596 = vunpack.c.l.b16 %v152
    %v597 = vunpack.c.h.b16 %v152
    %v598 = vunpack.c.l.b16 %v153
    %v599 = vunpack.c.h.b16 %v153
    %v600 = vunpack.c.l.b16 %v154
    %v601 = vunpack.c.h.b16 %v154
    %v602 = vunpack.c.l.b16 %v155
    %v603 = vunpack.c.h.b16 %v155
    %v604 = vunpack.c.l.b16 %v156
    %v605 = vunpack.c.h.b16 %v156
    %v606 = vunpack.c.l.b16 %v157
    %v607 = vunpack.c.h.b16 %v157
    %v608 = vunpack.c.l.b16 %v158
    %v609 = vunpack.c.h.b16 %v158
    %v610 = vunpack.c.l.b16 %v159
    %v611 = vunpack.c.h.b16 %v159
    %v612 = vunpack.c.l.b16 %v160
    %v613 = vunpack.c.h.b16 %v160
    %v614 = vunpack.c.l.b16 %v161
    %v615 = vunpack.c.h.b16 %v161
    %v616 = vunpack.c.l.b16 %v162
    %v617 = vunpack.c.h.b16 %v162
    %v618 = vunpack.c.l.b16 %v163
    %v619 = vunpack.c.h.b16 %v163
    %v620 = vunpack.c.l.b16 %v164
    %v621 = vunpack.c.h.b16 %v164
    %v622 = vunpack.c.l.b16 %v165
    %v623 = vunpack.c.h.b16 %v165
    %v624 = vunpack.c.l.b16 %v166
    %v625 = vunpack.c.h.b16 %v166
    %v626 = vunpack.c.l.b16 %v167
    %v627 = vunpack.c.h.b16 %v167
    %v628 = vunpack.c.l.b16 %v168
    %v629 = vunpack.c.h.b16 %v168
    %v630 = vunpack.c.l.b16 %v169
    %v631 = vunpack.c.h.b16 %v169
    %v632 = vunpack.c.l.b16 %v170
    %v633 = vunpack.c.h.b16 %v170
    %v634 = vunpack.c.l.b16 %v171
    %v635 = vunpack.c.h.b16 %v171
    %v636 = vunpack.c.l.b16 %v172
    %v637 = vunpack.c.h.b16 %v172
    %v638 = vunpack.c.l.b16 %v173
    %v639 = vunpack.c.h.b16 %v173
    %v640 = vunpack.c.l.b16 %v174
    %v641 = vunpack.c.h.b16 %v174
    %v642 = vunpack.c.l.b16 %v175
    %v643 = vunpack.c.h.b16 %v175
    %v644 = vunpack.c.l.b16 %v176
    %v645 = vunpack.c.h.b16 %v176
    %v646 = vunpack.c.l.b16 %v177
    %v647 = vunpack.c.h.b16 %v177
    %v648 = vunpack.c.l.b16 %v178
    %v649 = vunpack.c.h.b16 %v178
    %v650 = vunpack.c.l.b16 %v179
    %v651 = vunpack.c.h.b16 %v179
    %v652 = vunpack.c.l.b16 %v180
    %v653 = vunpack.c.h.b16 %v180
    %v654 = vunpack.c.l.b16 %v181
    %v655 = vunpack.c.h.b16 %v181
    %v656 = vunpack.c.l.b16 %v182
    %v657 = vunpack.c.h.b16 %v182
    %v658 = vunpack.c.l.b16 %v183
    %v659 = vunpack.c.h.b16 %v183
    %v660 = vunpack.c.l.b16 %v184
    %v661 = vunpack.c.h.b16 %v184
    %v662 = vunpack.c.l.b16 %v185
    %v663 = vunpack.c.h.b16 %v185
    %v664 = vunpack.c.l.b16 %v186
    %v665 = vunpack.c.h.b16 %v186
    %v666 = vunpack.c.l.b16 %v187
    %v667 = vunpack.c.h.b16 %v187
    %v668 = vunpack.c.l.b16 %v188
    %v669 = vunpack.c.h.b16 %v188
    %v670 = vunpack.c.l.b16 %v189
    %v671 = vunpack.c.h.b16 %v189
    %v672 = vunpack.c.l.b16 %v190
    %v673 = vunpack.c.h.b16 %v190
    %v674 = vunpack.c.l.b16 %v191
    %v675 = vunpack.c.h.b16 %v191
    %v676 = vunpack.c.l.b16 %v192
    %v677 = vunpack.c.h.b16 %v192
    %v678 = vunpack.c.l.b16 %v193
    %v679 = vunpack.c.h.b16 %v193
    %v680 = vunpack.c.l.b16 %v194
    %v681 = vunpack.c.h.b16 %v194
    %v682 = vunpack.c.l.b16 %v195
    %v683 = vunpack.c.h.b16 %v195
    %v684 = vunpack.c.l.b16 %v196
    %v685 = vunpack.c.h.b16 %v196
    %v686 = vunpack.c.l.b16 %v197
    %v687 = vunpack.c.h.b16 %v197
    %v688 = vunpack.c.l.b16 %v198
    %v689 = vunpack.c.h.b16 %v198
    %v690 = vunpack.c.l.b16 %v199
    %v691 = vunpack.c.h.b16 %v199
    %v692 = vunpack.c.l.b16 %v200
    %v693 = vunpack.c.h.b16 %v200
    %v694 = vunpack.c.l.b16 %v201
    %v695 = vunpack.c.h.b16 %v201
    %v696 = vunpack.c.l.b16 %v202
    %v697 = vunpack.c.h.b16 %v202
    %v698 = vunpack.c.l.b16 %v203
    %v699 = vunpack.c.h.b16 %v203
    %v700 = vunpack.c.l.b16 %v204
    %v701 = vunpack.c.h.b16 %v204
    %v702 = vunpack.c.l.b16 %v205
    %v703 = vunpack.c.h.b16 %v205
    %v704 = vunpack.c.l.b16 %v206
    %v705 = vunpack.c.h.b16 %v206
    %v706 = vunpack.c.l.b16 %v207
    %v707 = vunpack.c.h.b16 %v207
    %v708 = vunpack.c.l.b16 %v208
    %v709 = vunpack.c.h.b16 %v208
    %v710 = vunpack.c.l.b16 %v209
    %v711 = vunpack.c.h.b16 %v209
    %v712 = vunpack.c.l.b16 %v210
    %v713 = vunpack.c.h.b16 %v210
    %v714 = vunpack.c.l.b16 %v211
    %v715 = vunpack.c.h.b16 %v211
    %v716 = vunpack.c.l.b16 %v212
    %v717 = vunpack.c.h.b16 %v212
    %v718 = vunpack.c.l.b16 %v213
    %v719 = vunpack.c.h.b16 %v213
    %v720 = vunpack.c.l.b16 %v214
    %v721 = vunpack.c.h.b16 %v214
    %v722 = vunpack.c.l.b16 %v215
    %v723 = vunpack.c.h.b16 %v215
    %v724 = vunpack.c.l.b16 %v216
    %v725 = vunpack.c.h.b16 %v216
    %v726 = vunpack.c.l.b16 %v217
    %v727 = vunpack.c.h.b16 %v217
    %v728 = vunpack.c.l.b16 %v218
    %v729 = vunpack.c.h.b16 %v218
    %v730 = vunpack.c.l.b16 %v219
    %v731 = vunpack.c.h.b16 %v219
    %v732 = vunpack.c.l.b16 %v220
    %v733 = vunpack.c.h.b16 %v220
    %v734 = vunpack.c.l.b16 %v221
    %v735 = vunpack.c.h.b16 %v221
    %v736 = vunpack.c.l.b16 %v222
    %v737 = vunpack.c.h.b16 %v222
    %v738 = vunpack.c.l.b16 %v223
    %v739 = vunpack.c.h.b16 %v223
    %v740 = vunpack.c.l.b16 %v224
    %v741 = vunpack.c.h.b16 %v224
    %v742 = vunpack.c.l.b16 %v225
    %v743 = vunpack.c.h.b16 %v225
    %v744 = vunpack.c.l.b16 %v226
    %v745 = vunpack.c.h.b16 %v226
    %v746 = vunpack.c.l.b16 %v227
    %v747 = vunpack.c.h.b16 %v227
    %v748 = vunpack.c.l.b16 %v228
    %v749 = vunpack.c.h.b16 %v228
    %v750 = vunpack.c.l.b16 %v229
    %v751 = vunpack.c.h.b16 %v229
    %v752 = vunpack.c.l.b16 %v230
    %v753 = vunpack.c.h.b16 %v230
    %v754 = vunpack.c.l.b16 %v231
    %v755 = vunpack.c.h.b16 %v231
    %v756 = vunpack.c.l.b16 %v232
    %v757 = vunpack.c.h.b16 %v232
    %v758 = vunpack.c.l.b16 %v233
    %v759 = vunpack.c.h.b16 %v233
    %v760 = vunpack.c.l.b16 %v234
    %v761 = vunpack.c.h.b16 %v234
    %v762 = vunpack.c.l.b16 %v235
    %v763 = vunpack.c.h.b16 %v235
    %v764 = vunpack.c.l.b16 %v236
    %v765 = vunpack.c.h.b16 %v236
    %v766 = vunpack.c.l.b16 %v237
    %v767 = vunpack.c.h.b16 %v237
    %v768 = vunpack.c.l.b16 %v238
    %v769 = vunpack.c.h.b16 %v238
    %v770 = vunpack.c.l.b16 %v239
    %v771 = vunpack.c.h.b16 %v239
    %v772 = vunpack.c.l.b16 %v240
    %v773 = vunpack.c.h.b16 %v240
    %v774 = vunpack.c.l.b16 %v241
    %v775 = vunpack.c.h.b16 %v241
    %v776 = vunpack.c.l.b16 %v242
    %v777 = vunpack.c.h.b16 %v242
    %v778 = vunpack.c.l.b16 %v243
    %v779 = vunpack.c.h.b16 %v243
    %v780 = vunpack.c.l.b16 %v244
    %v781 = vunpack.c.h.b16 %v244
    %v782 = vunpack.c.l.b16 %v245
    %v783 = vunpack.c.h.b16 %v245
    %v784 = vunpack.c.l.b16 %v246
    %v785 = vunpack.c.h.b16 %v246
    %v786 = vunpack.c.l.b16 %v247
    %v787 = vunpack.c.h.b16 %v247
    %v788 = vunpack.c.l.b16 %v248
    %v789 = vunpack.c.h.b16 %v248
    %v790 = vunpack.c.l.b16 %v249
    %v791 = vunpack.c.h.b16 %v249
    %v792 = vunpack.c.l.b16 %v250
    %v793 = vunpack.c.h.b16 %v250
    %v794 = vunpack.c.l.b16 %v251
    %v795 = vunpack.c.h.b16 %v251
    %v796 = vunpack.c.l.b16 %v252
    %v797 = vunpack.c.h.b16 %v252
    %v798 = vunpack.c.l.b16 %v253
    %v799 = vunpack.c.h.b16 %v253
    %v800 = vunpack.c.l.b16 %v254
    %v801 = vunpack.c.h.b16 %v254
    %v802 = vunpack.c.l.b16 %v255
    %v803 = vunpack.c.h.b16 %v255
    %v804 = vunpack.c.l.b16 %v256
    %v805 = vunpack.c.h.b16 %v256
    %v806 = vunpack.c.l.b16 %v257
    %v807 = vunpack.c.h.b16 %v257
    %v808 = vunpack.c.l.b16 %v258
    %v809 = vunpack.c.h.b16 %v258
    %v810 = vunpack.c.l.b16 %v259
    %v811 = vunpack.c.h.b16 %v259
    %v812 = vunpack.c.l.b16 %v260
    %v813 = vunpack.c.h.b16 %v260
    %v814 = vunpack.c.l.b16 %v261
    %v815 = vunpack.c.h.b16 %v261
    %v816 = vunpack.c.l.b16 %v262
    %v817 = vunpack.c.h.b16 %v262
    %v818 = vunpack.c.l.b16 %v263
    %v819 = vunpack.c.h.b16 %v263
    %v820 = vunpack.c.l.b16 %v264
    %v821 = vunpack.c.h.b16 %v264
    %v822 = vunpack.c.l.b16 %v265
    %v823 = vunpack.c.h.b16 %v265
    %v824 = vunpack.c.l.b16 %v266
    %v825 = vunpack.c.h.b16 %v266
    %v826 = vunpack.c.l.b16 %v267
    %v827 = vunpack.c.h.b16 %v267
    %v828 = vunpack.c.l.b16 %v268
    %v829 = vunpack.c.h.b16 %v268
    %v830 = vunpack.c.l.b16 %v269
    %v831 = vunpack.c.h.b16 %v269
    %v832 = vunpack.c.l.b16 %v270
    %v833 = vunpack.c.h.b16 %v270
    %v834 = vunpack.c.l.b16 %v271
    %v835 = vunpack.c.h.b16 %v271
    %v836 = vunpack.c.l.b16 %v272
    %v837 = vunpack.c.h.b16 %v272
    %v838 = vunpack.c.l.b16 %v273
    %v839 = vunpack.c.h.b16 %v273
    %v840 = vunpack.c.l.b16 %v274
    %v841 = vunpack.c.h.b16 %v274
    %v842 = vunpack.c.l.b16 %v275
    %v843 = vunpack.c.h.b16 %v275
    %v844 = vunpack.c.l.b16 %v276
    %v845 = vunpack.c.h.b16 %v276
    %v846 = vunpack.c.l.b16 %v277
    %v847 = vunpack.c.h.b16 %v277
    %v848 = vunpack.c.l.b16 %v278
    %v849 = vunpack.c.h.b16 %v278
    %v850 = vunpack.c.l.b16 %v279
    %v851 = vunpack.c.h.b16 %v279
    %v852 = vunpack.c.l.b16 %v280
    %v853 = vunpack.c.h.b16 %v280
    %v854 = vunpack.c.l.b16 %v281
    %v855 = vunpack.c.h.b16 %v281
    %v856 = vunpack.c.l.b16 %v282
    %v857 = vunpack.c.h.b16 %v282
    %v858 = vunpack.c.l.b16 %v283
    %v859 = vunpack.c.h.b16 %v283
    %v860 = vunpack.c.l.b16 %v284
    %v861 = vunpack.c.h.b16 %v284
    %v862 = vunpack.c.l.b16 %v285
    %v863 = vunpack.c.h.b16 %v285
    %v864 = vunpack.c.l.b16 %v286
    %v865 = vunpack.c.h.b16 %v286
    %v866 = vunpack.c.l.b16 %v287
    %v867 = vunpack.c.h.b16 %v287
    %v868 = vunpack.c.l.b16 %v288
    %v869 = vunpack.c.h.b16 %v288
    %v870 = vunpack.c.l.b16 %v289
    %v871 = vunpack.c.h.b16 %v289
    %v872 = vunpack.c.l.b16 %v290
    %v873 = vunpack.c.h.b16 %v290
    %v874 = vunpack.c.l.b16 %v291
    %v875 = vunpack.c.h.b16 %v291
    %v876 = vunpack.c.l.b16 %v292
    %v877 = vunpack.c.h.b16 %v292
    %v878 = vunpack.c.l.b16 %v293
    %v879 = vunpack.c.h.b16 %v293
    %v880 = vunpack.c.l.b16 %v294
    %v881 = vunpack.c.h.b16 %v294
    %v882 = vunpack.c.l.b16 %v295
    %v883 = vunpack.c.h.b16 %v295
    %v884 = vunpack.c.l.b16 %v296
    %v885 = vunpack.c.h.b16 %v296
    %v886 = vunpack.c.l.b16 %v297
    %v887 = vunpack.c.h.b16 %v297
    %v888 = vunpack.c.l.b16 %v298
    %v889 = vunpack.c.h.b16 %v298
    %v890 = vunpack.c.l.b16 %v299
    %v891 = vunpack.c.h.b16 %v299
    %v892 = vunpack.c.l.b16 %v300
    %v893 = vunpack.c.h.b16 %v300
    %v894 = vunpack.c.l.b16 %v301
    %v895 = vunpack.c.h.b16 %v301
    %v896 = vunpack.c.l.b16 %v302
    %v897 = vunpack.c.h.b16 %v302
    %v898 = vunpack.c.l.b16 %v303
    %v899 = vunpack.c.h.b16 %v303
    %v900 = vunpack.c.l.b16 %v304
    %v901 = vunpack.c.h.b16 %v304
    %v902 = vunpack.c.l.b16 %v305
    %v903 = vunpack.c.h.b16 %v305
    %v904 = vunpack.c.l.b16 %v306
    %v905 = vunpack.c.h.b16 %v306
    %v906 = vunpack.c.l.b16 %v307
    %v907 = vunpack.c.h.b16 %v307
    %v908 = vunpack.c.l.b16 %v308
    %v909 = vunpack.c.h.b16 %v308
    %v910 = vunpack.c.l.b16 %v309
    %v911 = vunpack.c.h.b16 %v309
    %v912 = vunpack.c.l.b16 %v310
    %v913 = vunpack.c.h.b16 %v310
    %v914 = vunpack.c.l.b16 %v311
    %v915 = vunpack.c.h.b16 %v311
    %v916 = vunpack.c.l.b16 %v312
    %v917 = vunpack.c.h.b16 %v312
    %v918 = vunpack.c.l.b16 %v313
    %v919 = vunpack.c.h.b16 %v313
    %v920 = vunpack.c.l.b16 %v314
    %v921 = vunpack.c.h.b16 %v314
    %v922 = vunpack.c.l.b16 %v315
    %v923 = vunpack.c.h.b16 %v315
    %v924 = vunpack.c.l.b16 %v316
    %v925 = vunpack.c.h.b16 %v316
    %v926 = vunpack.c.l.b16 %v317
    %v927 = vunpack.c.h.b16 %v317
    %v928 = vunpack.c.l.b16 %v318
    %v929 = vunpack.c.h.b16 %v318
    %v930 = vunpack.c.l.b16 %v319
    %v931 = vunpack.c.h.b16 %v319
    %v932 = vunpack.c.l.b16 %v320
    %v933 = vunpack.c.h.b16 %v320
    %v934 = vunpack.c.l.b16 %v321
    %v935 = vunpack.c.h.b16 %v321
    %v936 = vunpack.c.l.b16 %v322
    %v937 = vunpack.c.h.b16 %v322
    %v938 = vunpack.c.l.b16 %v323
    %v939 = vunpack.c.h.b16 %v323
    %v940 = vunpack.c.l.b16 %v324
    %v941 = vunpack.c.h.b16 %v324
    %v942 = vunpack.c.l.b16 %v325
    %v943 = vunpack.c.h.b16 %v325
    %v944 = vunpack.c.l.b16 %v326
    %v945 = vunpack.c.h.b16 %v326
    %v946 = vpack.c.b16 %v566, %v562
    %v947 = vpack.c.b16 %v567, %v563
    %v948 = vpack.c.b16 %v568, %v564
    %v949 = vpack.c.b16 %v569, %v565
    %v950 = vpack.c.b16 %v574, %v570
    %v951 = vpack.c.b16 %v575, %v571
    %v952 = vpack.c.b16 %v576, %v572
    %v953 = vpack.c.b16 %v577, %v573
    %v954 = vpack.c.b16 %v582, %v578
    %v955 = vpack.c.b16 %v583, %v579
    %v956 = vpack.c.b16 %v584, %v580
    %v957 = vpack.c.b16 %v585, %v581
    %v958 = vpack.c.b16 %v590, %v586
    %v959 = vpack.c.b16 %v591, %v587
    %v960 = vpack.c.b16 %v592, %v588
    %v961 = vpack.c.b16 %v593, %v589
    %v962 = vpack.c.b16 %v598, %v594
    %v963 = vpack.c.b16 %v599, %v595
    %v964 = vpack.c.b16 %v600, %v596
    %v965 = vpack.c.b16 %v601, %v597
    %v966 = vpack.c.b16 %v606, %v602
    %v967 = vpack.c.b16 %v607, %v603
    %v968 = vpack.c.b16 %v608, %v604
    %v969 = vpack.c.b16 %v609, %v605
    %v970 = vpack.c.b16 %v614, %v610
    %v971 = vpack.c.b16 %v615, %v611
    %v972 = vpack.c.b16 %v616, %v612
    %v973 = vpack.c.b16 %v617, %v613
    %v974 = vpack.c.b16 %v622, %v618
    %v975 = vpack.c.b16 %v623, %v619
    %v976 = vpack.c.b16 %v624, %v620
    %v977 = vpack.c.b16 %v625, %v621
    %v978 = vpack.c.b16 %v630, %v626
    %v979 = vpack.c.b16 %v631, %v627
    %v980 = vpack.c.b16 %v632, %v628
    %v981 = vpack.c.b16 %v633, %v629
    %v982 = vpack.c.b16 %v638, %v634
    %v983 = vpack.c.b16 %v639, %v635
    %v984 = vpack.c.b16 %v640, %v636
    %v985 = vpack.c.b16 %v641, %v637
    %v986 = vpack.c.b16 %v646, %v642
    %v987 = vpack.c.b16 %v647, %v643
    %v988 = vpack.c.b16 %v648, %v644
    %v989 = vpack.c.b16 %v649, %v645
    %v990 = vpack.c.b16 %v654, %v650
    %v991 = vpack.c.b16 %v655, %v651
    %v992 = vpack.c.b16 %v656, %v652
    %v993 = vpack.c.b16 %v657, %v653
    %v994 = vpack.c.b16 %v662, %v658
    %v995 = vpack.c.b16 %v663, %v659
    %v996 = vpack.c.b16 %v664, %v660
    %v997 = vpack.c.b16 %v665, %v661
    %v998 = vpack.c.b16 %v670, %v666
    %v999 = vpack.c.b16 %v671, %v667
    %v1000 = vpack.c.b16 %v672, %v668
    %v1001 = vpack.c.b16 %v673, %v669
    %v1002 = vpack.c.b16 %v678, %v674
    %v1003 = vpack.c.b16 %v679, %v675
    %v1004 = vpack.c.b16 %v680, %v676
    %v1005 = vpack.c.b16 %v681, %v677
    %v1006 = vpack.c.b16 %v686, %v682
    %v1007 = vpack.c.b16 %v687, %v683
    %v1008 = vpack.c.b16 %v688, %v684
    %v1009 = vpack.c.b16 %v689, %v685
    %v1010 = vpack.c.b16 %v694, %v690
    %v1011 = vpack.c.b16 %v695, %v691
    %v1012 = vpack.c.b16 %v696, %v692
    %v1013 = vpack.c.b16 %v697, %v693
    %v1014 = vpack.c.b16 %v702, %v698
    %v1015 = vpack.c.b16 %v703, %v699
    %v1016 = vpack.c.b16 %v704, %v700
    %v1017 = vpack.c.b16 %v705, %v701
    %v1018 = vpack.c.b16 %v710, %v706
    %v1019 = vpack.c.b16 %v711, %v707
    %v1020 = vpack.c.b16 %v712, %v708
    %v1021 = vpack.c.b16 %v713, %v709
    %v1022 = vpack.c.b16 %v718, %v714
    %v1023 = vpack.c.b16 %v719, %v715
    %v1024 = vpack.c.b16 %v720, %v716
    %v1025 = vpack.c.b16 %v721, %v717
    %v1026 = vpack.c.b16 %v726, %v722
    %v1027 = vpack.c.b16 %v727, %v723
    %v1028 = vpack.c.b16 %v728, %v724
    %v1029 = vpack.c.b16 %v729, %v725
    %v1030 = vpack.c.b16 %v734, %v730
    %v1031 = vpack.c.b16 %v735, %v731
    %v1032 = vpack.c.b16 %v736, %v732
    %v1033 = vpack.c.b16 %v737, %v733
    %v1034 = vpack.c.b16 %v742, %v738
    %v1035 = vpack.c.b16 %v743, %v739
    %v1036 = vpack.c.b16 %v744, %v740
    %v1037 = vpack.c.b16 %v745, %v741
    %v1038 = vpack.c.b16 %v750, %v746
    %v1039 = vpack.c.b16 %v751, %v747
    %v1040 = vpack.c.b16 %v752, %v748
    %v1041 = vpack.c.b16 %v753, %v749
    %v1042 = vpack.c.b16 %v758, %v754
    %v1043 = vpack.c.b16 %v759, %v755
    %v1044 = vpack.c.b16 %v760, %v756
    %v1045 = vpack.c.b16 %v761, %v757
    %v1046 = vpack.c.b16 %v766, %v762
    %v1047 = vpack.c.b16 %v767, %v763
    %v1048 = vpack.c.b16 %v768, %v764
    %v1049 = vpack.c.b16 %v769, %v765
    %v1050 = vpack.c.b16 %v774, %v770
    %v1051 = vpack.c.b16 %v775, %v771
    %v1052 = vpack.c.b16 %v776, %v772
    %v1053 = vpack.c.b16 %v777, %v773
    %v1054 = vpack.c.b16 %v782, %v778
    %v1055 = vpack.c.b16 %v783, %v779
    %v1056 = vpack.c.b16 %v784, %v780
    %v1057 = vpack.c.b16 %v785, %v781
    %v1058 = vpack.c.b16 %v790, %v786
    %v1059 = vpack.c.b16 %v791, %v787
    %v1060 = vpack.c.b16 %v792, %v788
    %v1061 = vpack.c.b16 %v793, %v789
    %v1062 = vpack.c.b16 %v798, %v794
    %v1063 = vpack.c.b16 %v799, %v795
    %v1064 = vpack.c.b16 %v800, %v796
    %v1065 = vpack.c.b16 %v801, %v797
    %v1066 = vpack.c.b16 %v806, %v802
    %v1067 = vpack.c.b16 %v807, %v803
    %v1068 = vpack.c.b16 %v808, %v804
    %v1069 = vpack.c.b16 %v809, %v805
    %v1070 = vpack.c.b16 %v814, %v810
    %v1071 = vpack.c.b16 %v815, %v811
    %v1072 = vpack.c.b16 %v816, %v812
    %v1073 = vpack.c.b16 %v817, %v813
    %v1074 = vpack.c.b16 %v822, %v818
    %v1075 = vpack.c.b16 %v823, %v819
    %v1076 = vpack.c.b16 %v824, %v820
    %v1077 = vpack.c.b16 %v825, %v821
    %v1078 = vpack.c.b16 %v830, %v826
    %v1079 = vpack.c.b16 %v831, %v827
    %v1080 = vpack.c.b16 %v832, %v828
    %v1081 = vpack.c.b16 %v833, %v829
    %v1082 = vpack.c.b16 %v838, %v834
    %v1083 = vpack.c.b16 %v839, %v835
    %v1084 = vpack.c.b16 %v840, %v836
    %v1085 = vpack.c.b16 %v841, %v837
    %v1086 = vpack.c.b16 %v846, %v842
    %v1087 = vpack.c.b16 %v847, %v843
    %v1088 = vpack.c.b16 %v848, %v844
    %v1089 = vpack.c.b16 %v849, %v845
    %v1090 = vpack.c.b16 %v854, %v850
    %v1091 = vpack.c.b16 %v855, %v851
    %v1092 = vpack.c.b16 %v856, %v852
    %v1093 = vpack.c.b16 %v857, %v853
    %v1094 = vpack.c.b16 %v862, %v858
    %v1095 = vpack.c.b16 %v863, %v859
    %v1096 = vpack.c.b16 %v864, %v860
    %v1097 = vpack.c.b16 %v865, %v861
    %v1098 = vpack.c.b16 %v870, %v866
    %v1099 = vpack.c.b16 %v871, %v867
    %v1100 = vpack.c.b16 %v872, %v868
    %v1101 = vpack.c.b16 %v873, %v869
    %v1102 = vpack.c.b16 %v878, %v874
    %v1103 = vpack.c.b16 %v879, %v875
    %v1104 = vpack.c.b16 %v880, %v876
    %v1105 = vpack.c.b16 %v881, %v877
    %v1106 = vpack.c.b16 %v886, %v882
    %v1107 = vpack.c.b16 %v887, %v883
    %v1108 = vpack.c.b16 %v888, %v884
    %v1109 = vpack.c.b16 %v889, %v885
    %v1110 = vpack.c.b16 %v894, %v890
    %v1111 = vpack.c.b16 %v895, %v891
    %v1112 = vpack.c.b16 %v896, %v892
    %v1113 = vpack.c.b16 %v897, %v893
    %v1114 = vpack.c.b16 %v902, %v898
    %v1115 = vpack.c.b16 %v903, %v899
    %v1116 = vpack.c.b16 %v904, %v900
    %v1117 = vpack.c.b16 %v905, %v901
    %v1118 = vpack.c.b16 %v910, %v906
    %v1119 = vpack.c.b16 %v911, %v907
    %v1120 = vpack.c.b16 %v912, %v908
    %v1121 = vpack.c.b16 %v913, %v909
    %v1122 = vpack.c.b16 %v918, %v914
    %v1123 = vpack.c.b16 %v919, %v915
    %v1124 = vpack.c.b16 %v920, %v916
    %v1125 = vpack.c.b16 %v921, %v917
    %v1126 = vpack.c.b16 %v926, %v922
    %v1127 = vpack.c.b16 %v927, %v923
    %v1128 = vpack.c.b16 %v928, %v924
    %v1129 = vpack.c.b16 %v929, %v925
    %v1130 = vpack.c.b16 %v934, %v930
    %v1131 = vpack.c.b16 %v935, %v931
    %v1132 = vpack.c.b16 %v936, %v932
    %v1133 = vpack.c.b16 %v937, %v933
    %v1134 = vpack.c.b16 %v942, %v938
    %v1135 = vpack.c.b16 %v943, %v939
    %v1136 = vpack.c.b16 %v944, %v940
    %v1137 = vpack.c.b16 %v945, %v941
    %1330 = vmatprep.subr.bf16.mxu0 %v947
    %1331 = vmatpush1.bf16.msra.mxu0 %v946
    %1332 = vmatprep.subr.bf16.mxu0 %v951
    %1333 = vmatpush1.bf16.msra.mxu0 %v950
    %1334 = vmatprep.subr.bf16.mxu0 %v955
    %1335 = vmatpush1.bf16.msra.mxu0 %v954
    %1336 = vmatprep.subr.bf16.mxu0 %v959
    %1337 = vmatpush1.bf16.msra.mxu0 %v958
    %1338 = vmatprep.subr.bf16.mxu0 %v963
    %1339 = vmatpush1.bf16.msra.mxu0 %v962
    %1340 = vmatprep.subr.bf16.mxu0 %v967
    %1341 = vmatpush1.bf16.msra.mxu0 %v966
    %1342 = vmatprep.subr.bf16.mxu0 %v971
    %1343 = vmatpush1.bf16.msra.mxu0 %v970
    %1344 = vmatprep.subr.bf16.mxu0 %v975
    %1345 = vmatpush1.bf16.msra.mxu0 %v974
    %1346 = vmatprep.subr.bf16.mxu0 %v979
    %1347 = vmatpush1.bf16.msra.mxu0 %v978
    %1348 = vmatprep.subr.bf16.mxu0 %v983
    %1349 = vmatpush1.bf16.msra.mxu0 %v982
    %1350 = vmatprep.subr.bf16.mxu0 %v987
    %1351 = vmatpush1.bf16.msra.mxu0 %v986
    %1352 = vmatprep.subr.bf16.mxu0 %v991
    %1353 = vmatpush1.bf16.msra.mxu0 %v990
    %1354 = vmatprep.subr.bf16.mxu0 %v995
    %1355 = vmatpush1.bf16.msra.mxu0 %v994
    %1356 = vmatprep.subr.bf16.mxu0 %v999
    %1357 = vmatpush1.bf16.msra.mxu0 %v998
    %1358 = vmatprep.subr.bf16.mxu0 %v1003
    %1359 = vmatpush1.bf16.msra.mxu0 %v1002
    %1360 = vmatprep.subr.bf16.mxu0 %v1007
    %1361 = vmatpush1.bf16.msra.mxu0 %v1006
    %1362 = vmatprep.mubr.bf16.mxu0 %v359
    %1363 = vmatmul.mubr.bf16.gmra.mrb[0].mxu0 %v358
    %v1364 = vpop.f32.mrb[0].mxu0
    %v1365 = vadd.f32 0.0, %v1364
    %v1366 = vpop.f32.mrb[0].mxu0
    %v1367 = vadd.f32 0.0, %v1366
    %v1368 = vpop.f32.mrb[0].mxu0
    %v1369 = vpop.f32.mrb[0].mxu0
    %1370 = vdwg.mxu0
    %1371 = vmatprep.subr.bf16.mxu0 %v1011
    %1372 = vmatpush1.bf16.msra.mxu0 %v1010
    %1373 = vmatprep.subr.bf16.mxu0 %v1015
    %1374 = vmatpush1.bf16.msra.mxu0 %v1014
    %1375 = vmatprep.subr.bf16.mxu0 %v1019
    %1376 = vmatpush1.bf16.msra.mxu0 %v1018
    %1377 = vmatprep.subr.bf16.mxu0 %v1023
    %1378 = vmatpush1.bf16.msra.mxu0 %v1022
    %1379 = vmatprep.subr.bf16.mxu0 %v1027
    %1380 = vmatpush1.bf16.msra.mxu0 %v1026
    %1381 = vmatprep.subr.bf16.mxu0 %v1031
    %1382 = vmatpush1.bf16.msra.mxu0 %v1030
    %1383 = vmatprep.subr.bf16.mxu0 %v1035
    %1384 = vmatpush1.bf16.msra.mxu0 %v1034
    %1385 = vmatprep.subr.bf16.mxu0 %v1039
    %1386 = vmatpush1.bf16.msra.mxu0 %v1038
    %1387 = vmatprep.subr.bf16.mxu0 %v1043
    %1388 = vmatpush1.bf16.msra.mxu0 %v1042
    %1389 = vmatprep.subr.bf16.mxu0 %v1047
    %1390 = vmatpush1.bf16.msra.mxu0 %v1046
    %1391 = vmatprep.subr.bf16.mxu0 %v1051
    %1392 = vmatpush1.bf16.msra.mxu0 %v1050
    %1393 = vmatprep.subr.bf16.mxu0 %v1055
    %1394 = vmatpush1.bf16.msra.mxu0 %v1054
    %1395 = vmatprep.subr.bf16.mxu0 %v1059
    %1396 = vmatpush1.bf16.msra.mxu0 %v1058
    %1397 = vmatprep.subr.bf16.mxu0 %v1063
    %1398 = vmatpush1.bf16.msra.mxu0 %v1062
    %1399 = vmatprep.subr.bf16.mxu0 %v1067
    %1400 = vmatpush1.bf16.msra.mxu0 %v1066
    %1401 = vmatprep.subr.bf16.mxu0 %v1071
    %1402 = vmatpush1.bf16.msra.mxu0 %v1070
    %1403 = vmatprep.mubr.bf16.mxu0 %v361
    %1404 = vmatmul.mubr.bf16.gmra.mrb[0].mxu0 %v360
    %v1405 = vpop.f32.mrb[0].mxu0
    %v1406 = vadd.f32 %v1365, %v1405
    %v1407 = vpop.f32.mrb[0].mxu0
    %v1408 = vadd.f32 %v1367, %v1407
    %v1409 = vpop.f32.mrb[0].mxu0
    %v1410 = vpop.f32.mrb[0].mxu0
    %1411 = vdwg.mxu0
    %1412 = vmatprep.subr.bf16.mxu0 %v1075
    %1413 = vmatpush1.bf16.msra.mxu0 %v1074
    %1414 = vmatprep.subr.bf16.mxu0 %v1079
    %1415 = vmatpush1.bf16.msra.mxu0 %v1078
    %1416 = vmatprep.subr.bf16.mxu0 %v1083
    %1417 = vmatpush1.bf16.msra.mxu0 %v1082
    %1418 = vmatprep.subr.bf16.mxu0 %v1087
    %1419 = vmatpush1.bf16.msra.mxu0 %v1086
    %1420 = vmatprep.subr.bf16.mxu0 %v1091
    %1421 = vmatpush1.bf16.msra.mxu0 %v1090
    %1422 = vmatprep.subr.bf16.mxu0 %v1095
    %1423 = vmatpush1.bf16.msra.mxu0 %v1094
    %1424 = vmatprep.subr.bf16.mxu0 %v1099
    %1425 = vmatpush1.bf16.msra.mxu0 %v1098
    %1426 = vmatprep.subr.bf16.mxu0 %v1103
    %1427 = vmatpush1.bf16.msra.mxu0 %v1102
    %1428 = vmatprep.subr.bf16.mxu0 %v1107
    %1429 = vmatpush1.bf16.msra.mxu0 %v1106
    %1430 = vmatprep.subr.bf16.mxu0 %v1111
    %1431 = vmatpush1.bf16.msra.mxu0 %v1110
    %1432 = vmatprep.subr.bf16.mxu0 %v1115
    %1433 = vmatpush1.bf16.msra.mxu0 %v1114
    %1434 = vmatprep.subr.bf16.mxu0 %v1119
    %1435 = vmatpush1.bf16.msra.mxu0 %v1118
    %1436 = vmatprep.subr.bf16.mxu0 %v1123
    %1437 = vmatpush1.bf16.msra.mxu0 %v1122
    %1438 = vmatprep.subr.bf16.mxu0 %v1127
    %1439 = vmatpush1.bf16.msra.mxu0 %v1126
    %1440 = vmatprep.subr.bf16.mxu0 %v1131
    %1441 = vmatpush1.bf16.msra.mxu0 %v1130
    %1442 = vmatprep.subr.bf16.mxu0 %v1135
    %1443 = vmatpush1.bf16.msra.mxu0 %v1134
    %1444 = vmatprep.mubr.bf16.mxu0 %v363
    %1445 = vmatmul.mubr.bf16.gmra.mrb[0].mxu0 %v362
    %v1446 = vpop.f32.mrb[0].mxu0
    %v1447 = vadd.f32 %v1406, %v1446
    %v1448 = vpop.f32.mrb[0].mxu0
    %v1449 = vadd.f32 %v1408, %v1448
    %v1450 = vpop.f32.mrb[0].mxu0
    %v1451 = vpop.f32.mrb[0].mxu0
    %1452 = vdwg.mxu0
    %1453 = vmatprep.subr.bf16.mxu0 %v949
    %1454 = vmatpush1.bf16.msra.mxu0 %v948
    %1455 = vmatprep.subr.bf16.mxu0 %v953
    %1456 = vmatpush1.bf16.msra.mxu0 %v952
    %1457 = vmatprep.subr.bf16.mxu0 %v957
    %1458 = vmatpush1.bf16.msra.mxu0 %v956
    %1459 = vmatprep.subr.bf16.mxu0 %v961
    %1460 = vmatpush1.bf16.msra.mxu0 %v960
    %1461 = vmatprep.subr.bf16.mxu0 %v965
    %1462 = vmatpush1.bf16.msra.mxu0 %v964
    %1463 = vmatprep.subr.bf16.mxu0 %v969
    %1464 = vmatpush1.bf16.msra.mxu0 %v968
    %1465 = vmatprep.subr.bf16.mxu0 %v973
    %1466 = vmatpush1.bf16.msra.mxu0 %v972
    %1467 = vmatprep.subr.bf16.mxu0 %v977
    %1468 = vmatpush1.bf16.msra.mxu0 %v976
    %1469 = vmatprep.subr.bf16.mxu0 %v981
    %1470 = vmatpush1.bf16.msra.mxu0 %v980
    %1471 = vmatprep.subr.bf16.mxu0 %v985
    %1472 = vmatpush1.bf16.msra.mxu0 %v984
    %1473 = vmatprep.subr.bf16.mxu0 %v989
    %1474 = vmatpush1.bf16.msra.mxu0 %v988
    %1475 = vmatprep.subr.bf16.mxu0 %v993
    %1476 = vmatpush1.bf16.msra.mxu0 %v992
    %1477 = vmatprep.subr.bf16.mxu0 %v997
    %1478 = vmatpush1.bf16.msra.mxu0 %v996
    %1479 = vmatprep.subr.bf16.mxu0 %v1001
    %1480 = vmatpush1.bf16.msra.mxu0 %v1000
    %1481 = vmatprep.subr.bf16.mxu0 %v1005
    %1482 = vmatpush1.bf16.msra.mxu0 %v1004
    %1483 = vmatprep.subr.bf16.mxu0 %v1009
    %1484 = vmatpush1.bf16.msra.mxu0 %v1008
    %1485 = vmatprep.mubr.bf16.mxu0 %v359
    %1486 = vmatmul.mubr.bf16.gmra.mrb[0].mxu0 %v358
    %v1487 = vpop.f32.mrb[0].mxu0
    %v1488 = vadd.f32 0.0, %v1487
    %v1489 = vpop.f32.mrb[0].mxu0
    %v1490 = vadd.f32 0.0, %v1489
    %v1491 = vpop.f32.mrb[0].mxu0
    %v1492 = vpop.f32.mrb[0].mxu0
    %1493 = vdwg.mxu0
    %1494 = vmatprep.subr.bf16.mxu0 %v1013
    %1495 = vmatpush1.bf16.msra.mxu0 %v1012
    %1496 = vmatprep.subr.bf16.mxu0 %v1017
    %1497 = vmatpush1.bf16.msra.mxu0 %v1016
    %1498 = vmatprep.subr.bf16.mxu0 %v1021
    %1499 = vmatpush1.bf16.msra.mxu0 %v1020
    %1500 = vmatprep.subr.bf16.mxu0 %v1025
    %1501 = vmatpush1.bf16.msra.mxu0 %v1024
    %1502 = vmatprep.subr.bf16.mxu0 %v1029
    %1503 = vmatpush1.bf16.msra.mxu0 %v1028
    %1504 = vmatprep.subr.bf16.mxu0 %v1033
    %1505 = vmatpush1.bf16.msra.mxu0 %v1032
    %1506 = vmatprep.subr.bf16.mxu0 %v1037
    %1507 = vmatpush1.bf16.msra.mxu0 %v1036
    %1508 = vmatprep.subr.bf16.mxu0 %v1041
    %1509 = vmatpush1.bf16.msra.mxu0 %v1040
    %1510 = vmatprep.subr.bf16.mxu0 %v1045
    %1511 = vmatpush1.bf16.msra.mxu0 %v1044
    %1512 = vmatprep.subr.bf16.mxu0 %v1049
    %1513 = vmatpush1.bf16.msra.mxu0 %v1048
    %1514 = vmatprep.subr.bf16.mxu0 %v1053
    %1515 = vmatpush1.bf16.msra.mxu0 %v1052
    %1516 = vmatprep.subr.bf16.mxu0 %v1057
    %1517 = vmatpush1.bf16.msra.mxu0 %v1056
    %1518 = vmatprep.subr.bf16.mxu0 %v1061
    %1519 = vmatpush1.bf16.msra.mxu0 %v1060
    %1520 = vmatprep.subr.bf16.mxu0 %v1065
    %1521 = vmatpush1.bf16.msra.mxu0 %v1064
    %1522 = vmatprep.subr.bf16.mxu0 %v1069
    %1523 = vmatpush1.bf16.msra.mxu0 %v1068
    %1524 = vmatprep.subr.bf16.mxu0 %v1073
    %1525 = vmatpush1.bf16.msra.mxu0 %v1072
    %1526 = vmatprep.mubr.bf16.mxu0 %v361
    %1527 = vmatmul.mubr.bf16.gmra.mrb[0].mxu0 %v360
    %v1528 = vpop.f32.mrb[0].mxu0
    %v1529 = vadd.f32 %v1488, %v1528
    %v1530 = vpop.f32.mrb[0].mxu0
    %v1531 = vadd.f32 %v1490, %v1530
    %v1532 = vpop.f32.mrb[0].mxu0
    %v1533 = vpop.f32.mrb[0].mxu0
    %1534 = vdwg.mxu0
    %1535 = vmatprep.subr.bf16.mxu0 %v1077
    %1536 = vmatpush1.bf16.msra.mxu0 %v1076
    %1537 = vmatprep.subr.bf16.mxu0 %v1081
    %1538 = vmatpush1.bf16.msra.mxu0 %v1080
    %1539 = vmatprep.subr.bf16.mxu0 %v1085
    %1540 = vmatpush1.bf16.msra.mxu0 %v1084
    %1541 = vmatprep.subr.bf16.mxu0 %v1089
    %1542 = vmatpush1.bf16.msra.mxu0 %v1088
    %1543 = vmatprep.subr.bf16.mxu0 %v1093
    %1544 = vmatpush1.bf16.msra.mxu0 %v1092
    %1545 = vmatprep.subr.bf16.mxu0 %v1097
    %1546 = vmatpush1.bf16.msra.mxu0 %v1096
    %1547 = vmatprep.subr.bf16.mxu0 %v1101
    %1548 = vmatpush1.bf16.msra.mxu0 %v1100
    %1549 = vmatprep.subr.bf16.mxu0 %v1105
    %1550 = vmatpush1.bf16.msra.mxu0 %v1104
    %1551 = vmatprep.subr.bf16.mxu0 %v1109
    %1552 = vmatpush1.bf16.msra.mxu0 %v1108
    %1553 = vmatprep.subr.bf16.mxu0 %v1113
    %1554 = vmatpush1.bf16.msra.mxu0 %v1112
    %1555 = vmatprep.subr.bf16.mxu0 %v1117
    %1556 = vmatpush1.bf16.msra.mxu0 %v1116
    %1557 = vmatprep.subr.bf16.mxu0 %v1121
    %1558 = vmatpush1.bf16.msra.mxu0 %v1120
    %1559 = vmatprep.subr.bf16.mxu0 %v1125
    %1560 = vmatpush1.bf16.msra.mxu0 %v1124
    %1561 = vmatprep.subr.bf16.mxu0 %v1129
    %1562 = vmatpush1.bf16.msra.mxu0 %v1128
    %1563 = vmatprep.subr.bf16.mxu0 %v1133
    %1564 = vmatpush1.bf16.msra.mxu0 %v1132
    %1565 = vmatprep.subr.bf16.mxu0 %v1137
    %1566 = vmatpush1.bf16.msra.mxu0 %v1136
    %1567 = vmatprep.mubr.bf16.mxu0 %v363
    %1568 = vmatmul.mubr.bf16.gmra.mrb[0].mxu0 %v362
    %v1569 = vpop.f32.mrb[0].mxu0
    %v1570 = vadd.f32 %v1529, %v1569
    %v1571 = vpop.f32.mrb[0].mxu0
    %v1572 = vadd.f32 %v1531, %v1571
    %v1573 = vpop.f32.mrb[0].mxu0
    %v1574 = vpop.f32.mrb[0].mxu0
    %1575 = vdwg.mxu0
    %v1580 = vcombine.low %v1447, %v1449
    %v1581 = vcombine.low %v1570, %v1572
    %v1583 = vunpack.c.l.s4 1983009808
    %v1584 = vunpack.c.0.s8 %v1583
    %v1585 = vlaneseq
    %v1586 = vshrl.u32 %v1585, 7
    %v1587 = vsub.s32 %v1584, %v1586
    %v1588 = vrot.slane %v1580, %v1587
    %v1590 = vunpack.c.l.s4 1983009808
    %v1591 = vunpack.c.0.s8 %v1590
    %v1592 = vlaneseq
    %v1593 = vshrl.u32 %v1592, 7
    %v1594 = vsub.s32 %v1591, %v1593
    %v1595 = vrot.slane %v1581, %v1594
    %v1596 = vcombine.low %v1588, %v1595
    %1598 = vst [vmem:[#allocation5] sm:$0xff] %v1596
    // Predicated region
    $region14: #{temporal_model_forward.1} parent=1 // pred_check
      _
    $region15: #{temporal_model_forward.1} parent=1 // pred_check_branch
      %1600 = sbr.rel (0) target = $region17
    $region16: #{temporal_model_forward.1} parent=1 // pred_region
      %s1602 = ssub.s32 128, 128
      %1603 = vsyncadd [#allocation4], %s1602
      %s1605 = sshll.u32 [#allocation5], 4
      %s1606 = int_to_ptr.vmem [resolvable:$true] %s1605
      %1608 = dma.vmem_to_hbm [thread:$0]  %s1606, 128, %s2, [#allocation4]
    $region17: #{temporal_model_forward.1} parent=1 // pred_fallthru
      _
    // Predicated region
    $region18: #{temporal_model_forward.1} parent=1 // pred_check
      _
    $region19: #{temporal_model_forward.1} parent=1 // pred_check_branch
      %1610 = sbr.rel (0) target = $region21
    $region20: #{temporal_model_forward.1} parent=1 // pred_region
      %1611 = dma.done [#allocation4], 128
    $region21: #{temporal_model_forward.1} parent=1 // pred_fallthru
      _
    %1612 = vsyncpa [#allocation3], 1
    %1613 = vsyncpa [#allocation4], 1

</llo_original>
